<compile_context>
chip_gen: v5e
topology: v5e:2x2
jax: 0.10.0
libtpu: 0.0.40
codegen_flags: <defaults>
</compile_context>

<pallas_src>
import functools

import jax
import jax.numpy as jnp
from jax import lax
from jax.experimental import pallas as pl
from jax.experimental.pallas import tpu as pltpu


def _forecast_kernel(n_layers, E, H, T, B, x_ref, w_ref, vec_ref, out_ref):
    """x_ref:  (T*B, E) bf16, row t*B+b = x[b, t, :]  (time-major, flattened, E padded).
    w_ref:   bf16 weight slab, rows:
               [0 : E)                            = W_ih^T layer 0
               for l in 1..L-1, base = E + (l-1)*2H:
                 [base     : base +  H)           = W_ih^T layer l
                 [base + H : base + 2H)           = W_hh^T layer l   (contiguous with
                                                    W_ih^T -> single fused (2H,H) operand)
               [E + (L-1)*2H : E + (L-1)*2H + H)  = W_hh^T layer 0
    vec_ref: (L+4, H) f32 row slab:
               rows 0..L-1 = b_ih[l] + b_hh[l]
               row  L      = LayerNorm gamma,  row L+1 = LayerNorm beta
               row  L+2    = fc weight (length-H row), row L+3 = [fc bias, 0, ...]
    out_ref: (B, 1) f32.
    """
    f32, bf16 = jnp.float32, jnp.bfloat16
    L = n_layers

    # ---- hoisted weight / bias loads (once, off the per-tick serial chain) --------
    w_ih0 = w_ref[0:E, :]
    hh0_base = E + (L - 1) * 2 * H
    w_hh0 = w_ref[hh0_base:hh0_base + H, :]
    w_ih_l, w_fused_l = [], []
    for l in range(1, L):
        base = E + (l - 1) * 2 * H
        w_ih_l.append(w_ref[base:base + H, :])          # (H, H)  -> used at t == 0
        w_fused_l.append(w_ref[base:base + 2 * H, :])   # (2H, H) -> [W_ih^T; W_hh^T]
    biases = [vec_ref[l:l + 1, :] for l in range(L)]    # (1, H) each

    # ---- layer-0 input projection, batched over all timesteps (off the chain) -----
    xw0 = jnp.dot(x_ref[...], w_ih0, preferred_element_type=f32) + biases[0]  # (T*B, H)

    # ---- wavefront recurrence: tick tau computes layer l's step t = tau - l -------
    h = [None] * L                       # latest hidden value per layer, f32 (B, H)
    for tick in range(T + L - 1):
        new_h = list(h)
        for l in range(L):
            t = tick - l
            if t < 0 or t >= T:          # layer inactive at this tick (static gate)
                continue
            if l == 0:
                pre = xw0[t * B:(t + 1) * B, :]
                if t > 0:
                    pre = pre + jnp.dot(h[0].astype(bf16), w_hh0,
                                        preferred_element_type=f32)
            elif t == 0:                 # h_l(-1) == 0 -> input projection only
                pre = jnp.dot(h[l - 1].astype(bf16), w_ih_l[l - 1],
                              preferred_element_type=f32) + biases[l]
            else:                        # fused [h_{l-1,t} | h_{l,t-1}] @ [Wih; Whh]
                inp = jnp.concatenate([h[l - 1].astype(bf16), h[l].astype(bf16)],
                                      axis=-1)                          # (B, 2H)
                pre = jnp.dot(inp, w_fused_l[l - 1],
                              preferred_element_type=f32) + biases[l]
            new_h[l] = jnp.tanh(pre)
        h = new_h

    h_last = h[L - 1]                    # == rnn_out[:, -1, :]   (B, H), f32

    # ---- LayerNorm over hidden dim (torch defaults: eps=1e-5, affine) -------------
    gamma = vec_ref[L:L + 1, :]
    beta = vec_ref[L + 1:L + 2, :]
    mean = jnp.mean(h_last, axis=-1, keepdims=True)
    var = jnp.mean((h_last - mean) ** 2, axis=-1, keepdims=True)
    normed = (h_last - mean) * lax.rsqrt(var + 1e-5) * gamma + beta

    # Dropout is identity in eval/inference mode.
    # TODO(synk): training-mode dropout (pltpu PRNG + mask) not implemented.

    # ---- Linear(H, 1) as a lane reduction (no wasted N=1 MXU matmul) --------------
    fc_w = vec_ref[L + 2:L + 3, :]                                   # (1, H)
    fc_b = vec_ref[L + 3:L + 4, 0:1]                                 # (1, 1)
    out = jnp.sum(normed * fc_w, axis=-1, keepdims=True) + fc_b      # (B, 1)
    out_ref[...] = out.astype(out_ref.dtype)


def pack_params(params):
    """One-time packing of the module parameters into two lane-dense slabs.
    Hoisted out of the per-forward wrapper (perf review): concat/scatter cost is paid
    once at load time, so each forward issues exactly 3 input DMAs."""
    w_ih = list(params["w_ih"])          # layer0: (E, H); others: (H, H)   (= W_ih^T)
    w_hh = list(params["w_hh"])          # (H, H)                           (= W_hh^T)
    b = list(params["b"])                # (1, H)  (= b_ih + b_hh)
    L = len(w_ih)
    H = w_hh[0].shape[0]
    E = w_ih[0].shape[0]
    assert H % 8 == 0, "hidden_size must be a multiple of 8 for aligned slab slices"

    E_pad = ((E + 15) // 16) * 16        # keep bf16 slab row slices sublane aligned
    w_ih0 = w_ih[0]
    if E_pad != E:
        w_ih0 = jnp.concatenate(
            [w_ih0, jnp.zeros((E_pad - E, H), w_ih0.dtype)], axis=0)

    blocks = [w_ih0]
    for l in range(1, L):
        blocks += [w_ih[l], w_hh[l]]     # contiguous -> fused (2H, H) MXU operand
    blocks.append(w_hh[0])
    w_slab = jnp.concatenate(blocks, axis=0).astype(jnp.bfloat16)

    fc_b_row = jnp.zeros((1, H), jnp.float32).at[0, 0].set(params["fc_b"][0, 0])
    vec_slab = jnp.concatenate(
        b + [params["gamma"], params["beta"],
             params["fc_w"].reshape(1, H), fc_b_row], axis=0).astype(jnp.float32)

    return dict(w_slab=w_slab, vec_slab=vec_slab,
                n_layers=L, E=E, E_pad=E_pad, H=H)


def weather_forecastor_forward(x, packed):
    """x: (B, T, E) float32 (batch_first, like the PyTorch module). Returns (B, 1)."""
    B, T, E = x.shape
    L, H, E_pad = packed["n_layers"], packed["H"], packed["E_pad"]
    assert E + (E_pad - E) == E_pad and E <= E_pad

    # Layout plumbing only: time-major flat (T*B, E_pad) bf16 MXU operand.
    x_flat = jnp.transpose(x, (1, 0, 2)).reshape(T * B, E)
    if E_pad != E:
        x_flat = jnp.concatenate(
            [x_flat, jnp.zeros((T * B, E_pad - E), x_flat.dtype)], axis=1)
    x_flat = x_flat.astype(jnp.bfloat16)

    vmem = pl.BlockSpec(memory_space=pltpu.MemorySpace.VMEM)
    kernel = functools.partial(_forecast_kernel, L, E_pad, H, T, B)
    return pl.pallas_call(
        kernel,
        out_shape=jax.ShapeDtypeStruct((B, 1), jnp.float32),
        in_specs=[vmem, vmem, vmem],
        out_specs=vmem,
    )(x_flat, packed["w_slab"], packed["vec_slab"])


def init_params(key, embedding_dim, hidden_size, n_layers):
    """Deterministic init mirroring PyTorch's U(-1/sqrt(H), 1/sqrt(H)) for RNN/Linear."""
    H = hidden_size
    bound = 1.0 / jnp.sqrt(jnp.float32(H))

    def unif(k, shape):
        return jax.random.uniform(k, shape, jnp.float32, -bound, bound)

    keys = jax.random.split(key, 4 * n_layers + 4)
    w_ih, w_hh, b = [], [], []
    ki = 0
    for l in range(n_layers):
        in_dim = embedding_dim if l == 0 else H
        w_ih.append(unif(keys[ki], (in_dim, H))); ki += 1     # = W_ih^T
        w_hh.append(unif(keys[ki], (H, H)));      ki += 1     # = W_hh^T
        b_ih = unif(keys[ki], (1, H)); ki += 1
        b_hh = unif(keys[ki], (1, H)); ki += 1
        b.append(b_ih + b_hh)

    gamma = jnp.ones((1, H), jnp.float32)                     # LayerNorm weight
    beta = jnp.zeros((1, H), jnp.float32)                     # LayerNorm bias
    fc_w = unif(keys[ki], (H, 1)); ki += 1                    # Linear weight^T
    fc_b = unif(keys[ki], (1, 1)); ki += 1                    # Linear bias

    return dict(w_ih=w_ih, w_hh=w_hh, b=b, gamma=gamma, beta=beta,
                fc_w=fc_w, fc_b=fc_b)


def _reference_forward(x, params, mxu_dtype=jnp.float32):
    """Pure-JAX reference of the PyTorch forward.  mxu_dtype=bfloat16 mirrors the
    kernel's bf16-operand / f32-accumulate MXU dots for a tight structural check."""
    L = len(params["w_ih"])
    B, T, E = x.shape
    H = params["w_hh"][0].shape[0]
    c = lambda a: a.astype(mxu_dtype)
    seq = x
    for l in range(L):
        h = jnp.zeros((B, H), jnp.float32)
        outs = []
        for t in range(T):
            h = jnp.tanh(
                jnp.dot(c(seq[:, t, :]), c(params["w_ih"][l]),
                        preferred_element_type=jnp.float32)
                + jnp.dot(c(h), c(params["w_hh"][l]),
                          preferred_element_type=jnp.float32)
                + params["b"][l])
            outs.append(h)
        seq = jnp.stack(outs, axis=1)
    h_last = seq[:, -1, :]
    mean = jnp.mean(h_last, axis=-1, keepdims=True)
    var = jnp.mean((h_last - mean) ** 2, axis=-1, keepdims=True)
    normed = (h_last - mean) * lax.rsqrt(var + 1e-5) * params["gamma"] + params["beta"]
    return normed @ params["fc_w"] + params["fc_b"]


if __name__ == "__main__":
    # Small shapes consistent with the module's forward: (batch, seq, embedding_dim)
    B, T, E, H, n_layers = 2, 8, 8, 32, 2

    key = jax.random.PRNGKey(0)
    k_x, k_p = jax.random.split(key)
    x = jax.random.normal(k_x, (B, T, E), jnp.float32)
    params = init_params(k_p, E, H, n_layers)
    packed = pack_params(params)           # one-time slab packing (hoisted out of forward)

    out = weather_forecastor_forward(x, packed)
    out = jax.block_until_ready(out)
    assert out.shape == (B, 1) and out.dtype == jnp.float32

    # Tight structural check vs. a reference that mirrors the kernel's bf16 MXU operands.
    ref_bf16 = _reference_forward(x, params, mxu_dtype=jnp.bfloat16)
    assert jnp.allclose(out, ref_bf16, atol=2e-2, rtol=2e-2)

    # Loose check vs. the exact f32 PyTorch-semantics reference (tolerance loosened
    # because MXU operands are bf16, as recommended by the perf review).
    ref_f32 = _reference_forward(x, params, mxu_dtype=jnp.float32)
    assert jnp.allclose(out, ref_f32, atol=6e-2, rtol=6e-2)

    print("KERNEL_OK")
</pallas_src>

<mosaic_0001>
module attributes {stable_mosaic.version = 11 : i64} {
  func.func @_forecast_kernel(%arg0: memref<16x16xbf16, #tpu.memory_space<vmem>>, %arg1: memref<112x32xbf16, #tpu.memory_space<vmem>>, %arg2: memref<6x32xf32, #tpu.memory_space<vmem>>, %arg3: memref<2x1xf32, #tpu.memory_space<vmem>>) attributes {dimension_semantics = [], scalar_prefetch = 0 : i64, scratch_operands = 0 : i64, tpu.core_type = #tpu.core_type<tc>} {
    %c0 = arith.constant 0 : index
    %c0_0 = arith.constant 0 : index
    %0 = vector.load %arg1[%c0, %c0_0] : memref<112x32xbf16, #tpu.memory_space<vmem>>, vector<16x32xbf16>
    %c80 = arith.constant 80 : index
    %c0_1 = arith.constant 0 : index
    %1 = vector.load %arg1[%c80, %c0_1] : memref<112x32xbf16, #tpu.memory_space<vmem>>, vector<32x32xbf16>
    %c16 = arith.constant 16 : index
    %c0_2 = arith.constant 0 : index
    %2 = vector.load %arg1[%c16, %c0_2] : memref<112x32xbf16, #tpu.memory_space<vmem>>, vector<32x32xbf16>
    %c16_3 = arith.constant 16 : index
    %c0_4 = arith.constant 0 : index
    %3 = vector.load %arg1[%c16_3, %c0_4] : memref<112x32xbf16, #tpu.memory_space<vmem>>, vector<64x32xbf16>
    %c0_5 = arith.constant 0 : index
    %c0_6 = arith.constant 0 : index
    %4 = vector.load %arg2[%c0_5, %c0_6] : memref<6x32xf32, #tpu.memory_space<vmem>>, vector<1x32xf32>
    %c1 = arith.constant 1 : index
    %c0_7 = arith.constant 0 : index
    %5 = vector.load %arg2[%c1, %c0_7] : memref<6x32xf32, #tpu.memory_space<vmem>>, vector<1x32xf32>
    %c0_8 = arith.constant 0 : index
    %c0_9 = arith.constant 0 : index
    %6 = vector.load %arg0[%c0_8, %c0_9] : memref<16x16xbf16, #tpu.memory_space<vmem>>, vector<16x16xbf16>
    %cst = arith.constant dense<0.000000e+00> : vector<16x32xf32>
    %7 = tpu.matmul %6, %0, %cst {dimension_numbers = #tpu.dot_dimension_numbers<[1], [0], [0], [1], [0, 0, 1, 1], [], []>} : vector<16x16xbf16>, vector<16x32xbf16>, vector<16x32xf32> -> vector<16x32xf32>
    %8 = vector.broadcast %4 : vector<1x32xf32> to vector<16x32xf32>
    %9 = arith.addf %7, %8 : vector<16x32xf32>
    %10 = vector.extract_strided_slice %9 {offsets = [0, 0], sizes = [2, 32], strides = [1, 1]} : vector<16x32xf32> to vector<2x32xf32>
    %11 = math.tanh %10 : vector<2x32xf32>
    %12 = vector.extract_strided_slice %9 {offsets = [2, 0], sizes = [2, 32], strides = [1, 1]} : vector<16x32xf32> to vector<2x32xf32>
    %13 = arith.truncf %11 : vector<2x32xf32> to vector<2x32xbf16>
    %cst_10 = arith.constant dense<0.000000e+00> : vector<2x32xf32>
    %14 = tpu.matmul %13, %1, %cst_10 {dimension_numbers = #tpu.dot_dimension_numbers<[1], [0], [0], [1], [0, 0, 1, 1], [], []>} : vector<2x32xbf16>, vector<32x32xbf16>, vector<2x32xf32> -> vector<2x32xf32>
    %15 = arith.addf %12, %14 : vector<2x32xf32>
    %16 = math.tanh %15 : vector<2x32xf32>
    %17 = arith.truncf %11 : vector<2x32xf32> to vector<2x32xbf16>
    %cst_11 = arith.constant dense<0.000000e+00> : vector<2x32xf32>
    %18 = tpu.matmul %17, %2, %cst_11 {dimension_numbers = #tpu.dot_dimension_numbers<[1], [0], [0], [1], [0, 0, 1, 1], [], []>} : vector<2x32xbf16>, vector<32x32xbf16>, vector<2x32xf32> -> vector<2x32xf32>
    %19 = vector.broadcast %5 : vector<1x32xf32> to vector<2x32xf32>
    %20 = arith.addf %18, %19 : vector<2x32xf32>
    %21 = math.tanh %20 : vector<2x32xf32>
    %22 = vector.extract_strided_slice %9 {offsets = [4, 0], sizes = [2, 32], strides = [1, 1]} : vector<16x32xf32> to vector<2x32xf32>
    %23 = arith.truncf %16 : vector<2x32xf32> to vector<2x32xbf16>
    %cst_12 = arith.constant dense<0.000000e+00> : vector<2x32xf32>
    %24 = tpu.matmul %23, %1, %cst_12 {dimension_numbers = #tpu.dot_dimension_numbers<[1], [0], [0], [1], [0, 0, 1, 1], [], []>} : vector<2x32xbf16>, vector<32x32xbf16>, vector<2x32xf32> -> vector<2x32xf32>
    %25 = arith.addf %22, %24 : vector<2x32xf32>
    %26 = math.tanh %25 : vector<2x32xf32>
    %27 = arith.truncf %16 : vector<2x32xf32> to vector<2x32xbf16>
    %28 = arith.truncf %21 : vector<2x32xf32> to vector<2x32xbf16>
    %29 = tpu.concatenate %27, %28 in 1 : vector<2x32xbf16>, vector<2x32xbf16> -> vector<2x64xbf16>
    %cst_13 = arith.constant dense<0.000000e+00> : vector<2x32xf32>
    %30 = tpu.matmul %29, %3, %cst_13 {dimension_numbers = #tpu.dot_dimension_numbers<[1], [0], [0], [1], [0, 0, 1, 1], [], []>} : vector<2x64xbf16>, vector<64x32xbf16>, vector<2x32xf32> -> vector<2x32xf32>
    %31 = vector.broadcast %5 : vector<1x32xf32> to vector<2x32xf32>
    %32 = arith.addf %30, %31 : vector<2x32xf32>
    %33 = math.tanh %32 : vector<2x32xf32>
    %34 = vector.extract_strided_slice %9 {offsets = [6, 0], sizes = [2, 32], strides = [1, 1]} : vector<16x32xf32> to vector<2x32xf32>
    %35 = arith.truncf %26 : vector<2x32xf32> to vector<2x32xbf16>
    %cst_14 = arith.constant dense<0.000000e+00> : vector<2x32xf32>
    %36 = tpu.matmul %35, %1, %cst_14 {dimension_numbers = #tpu.dot_dimension_numbers<[1], [0], [0], [1], [0, 0, 1, 1], [], []>} : vector<2x32xbf16>, vector<32x32xbf16>, vector<2x32xf32> -> vector<2x32xf32>
    %37 = arith.addf %34, %36 : vector<2x32xf32>
    %38 = math.tanh %37 : vector<2x32xf32>
    %39 = arith.truncf %26 : vector<2x32xf32> to vector<2x32xbf16>
    %40 = arith.truncf %33 : vector<2x32xf32> to vector<2x32xbf16>
    %41 = tpu.concatenate %39, %40 in 1 : vector<2x32xbf16>, vector<2x32xbf16> -> vector<2x64xbf16>
    %cst_15 = arith.constant dense<0.000000e+00> : vector<2x32xf32>
    %42 = tpu.matmul %41, %3, %cst_15 {dimension_numbers = #tpu.dot_dimension_numbers<[1], [0], [0], [1], [0, 0, 1, 1], [], []>} : vector<2x64xbf16>, vector<64x32xbf16>, vector<2x32xf32> -> vector<2x32xf32>
    %43 = vector.broadcast %5 : vector<1x32xf32> to vector<2x32xf32>
    %44 = arith.addf %42, %43 : vector<2x32xf32>
    %45 = math.tanh %44 : vector<2x32xf32>
    %46 = vector.extract_strided_slice %9 {offsets = [8, 0], sizes = [2, 32], strides = [1, 1]} : vector<16x32xf32> to vector<2x32xf32>
    %47 = arith.truncf %38 : vector<2x32xf32> to vector<2x32xbf16>
    %cst_16 = arith.constant dense<0.000000e+00> : vector<2x32xf32>
    %48 = tpu.matmul %47, %1, %cst_16 {dimension_numbers = #tpu.dot_dimension_numbers<[1], [0], [0], [1], [0, 0, 1, 1], [], []>} : vector<2x32xbf16>, vector<32x32xbf16>, vector<2x32xf32> -> vector<2x32xf32>
    %49 = arith.addf %46, %48 : vector<2x32xf32>
    %50 = math.tanh %49 : vector<2x32xf32>
    %51 = arith.truncf %38 : vector<2x32xf32> to vector<2x32xbf16>
    %52 = arith.truncf %45 : vector<2x32xf32> to vector<2x32xbf16>
    %53 = tpu.concatenate %51, %52 in 1 : vector<2x32xbf16>, vector<2x32xbf16> -> vector<2x64xbf16>
    %cst_17 = arith.constant dense<0.000000e+00> : vector<2x32xf32>
    %54 = tpu.matmul %53, %3, %cst_17 {dimension_numbers = #tpu.dot_dimension_numbers<[1], [0], [0], [1], [0, 0, 1, 1], [], []>} : vector<2x64xbf16>, vector<64x32xbf16>, vector<2x32xf32> -> vector<2x32xf32>
    %55 = vector.broadcast %5 : vector<1x32xf32> to vector<2x32xf32>
    %56 = arith.addf %54, %55 : vector<2x32xf32>
    %57 = math.tanh %56 : vector<2x32xf32>
    %58 = vector.extract_strided_slice %9 {offsets = [10, 0], sizes = [2, 32], strides = [1, 1]} : vector<16x32xf32> to vector<2x32xf32>
    %59 = arith.truncf %50 : vector<2x32xf32> to vector<2x32xbf16>
    %cst_18 = arith.constant dense<0.000000e+00> : vector<2x32xf32>
    %60 = tpu.matmul %59, %1, %cst_18 {dimension_numbers = #tpu.dot_dimension_numbers<[1], [0], [0], [1], [0, 0, 1, 1], [], []>} : vector<2x32xbf16>, vector<32x32xbf16>, vector<2x32xf32> -> vector<2x32xf32>
    %61 = arith.addf %58, %60 : vector<2x32xf32>
    %62 = math.tanh %61 : vector<2x32xf32>
    %63 = arith.truncf %50 : vector<2x32xf32> to vector<2x32xbf16>
    %64 = arith.truncf %57 : vector<2x32xf32> to vector<2x32xbf16>
    %65 = tpu.concatenate %63, %64 in 1 : vector<2x32xbf16>, vector<2x32xbf16> -> vector<2x64xbf16>
    %cst_19 = arith.constant dense<0.000000e+00> : vector<2x32xf32>
    %66 = tpu.matmul %65, %3, %cst_19 {dimension_numbers = #tpu.dot_dimension_numbers<[1], [0], [0], [1], [0, 0, 1, 1], [], []>} : vector<2x64xbf16>, vector<64x32xbf16>, vector<2x32xf32> -> vector<2x32xf32>
    %67 = vector.broadcast %5 : vector<1x32xf32> to vector<2x32xf32>
    %68 = arith.addf %66, %67 : vector<2x32xf32>
    %69 = math.tanh %68 : vector<2x32xf32>
    %70 = vector.extract_strided_slice %9 {offsets = [12, 0], sizes = [2, 32], strides = [1, 1]} : vector<16x32xf32> to vector<2x32xf32>
    %71 = arith.truncf %62 : vector<2x32xf32> to vector<2x32xbf16>
    %cst_20 = arith.constant dense<0.000000e+00> : vector<2x32xf32>
    %72 = tpu.matmul %71, %1, %cst_20 {dimension_numbers = #tpu.dot_dimension_numbers<[1], [0], [0], [1], [0, 0, 1, 1], [], []>} : vector<2x32xbf16>, vector<32x32xbf16>, vector<2x32xf32> -> vector<2x32xf32>
    %73 = arith.addf %70, %72 : vector<2x32xf32>
    %74 = math.tanh %73 : vector<2x32xf32>
    %75 = arith.truncf %62 : vector<2x32xf32> to vector<2x32xbf16>
    %76 = arith.truncf %69 : vector<2x32xf32> to vector<2x32xbf16>
    %77 = tpu.concatenate %75, %76 in 1 : vector<2x32xbf16>, vector<2x32xbf16> -> vector<2x64xbf16>
    %cst_21 = arith.constant dense<0.000000e+00> : vector<2x32xf32>
    %78 = tpu.matmul %77, %3, %cst_21 {dimension_numbers = #tpu.dot_dimension_numbers<[1], [0], [0], [1], [0, 0, 1, 1], [], []>} : vector<2x64xbf16>, vector<64x32xbf16>, vector<2x32xf32> -> vector<2x32xf32>
    %79 = vector.broadcast %5 : vector<1x32xf32> to vector<2x32xf32>
    %80 = arith.addf %78, %79 : vector<2x32xf32>
    %81 = math.tanh %80 : vector<2x32xf32>
    %82 = vector.extract_strided_slice %9 {offsets = [14, 0], sizes = [2, 32], strides = [1, 1]} : vector<16x32xf32> to vector<2x32xf32>
    %83 = arith.truncf %74 : vector<2x32xf32> to vector<2x32xbf16>
    %cst_22 = arith.constant dense<0.000000e+00> : vector<2x32xf32>
    %84 = tpu.matmul %83, %1, %cst_22 {dimension_numbers = #tpu.dot_dimension_numbers<[1], [0], [0], [1], [0, 0, 1, 1], [], []>} : vector<2x32xbf16>, vector<32x32xbf16>, vector<2x32xf32> -> vector<2x32xf32>
    %85 = arith.addf %82, %84 : vector<2x32xf32>
    %86 = math.tanh %85 : vector<2x32xf32>
    %87 = arith.truncf %74 : vector<2x32xf32> to vector<2x32xbf16>
    %88 = arith.truncf %81 : vector<2x32xf32> to vector<2x32xbf16>
    %89 = tpu.concatenate %87, %88 in 1 : vector<2x32xbf16>, vector<2x32xbf16> -> vector<2x64xbf16>
    %cst_23 = arith.constant dense<0.000000e+00> : vector<2x32xf32>
    %90 = tpu.matmul %89, %3, %cst_23 {dimension_numbers = #tpu.dot_dimension_numbers<[1], [0], [0], [1], [0, 0, 1, 1], [], []>} : vector<2x64xbf16>, vector<64x32xbf16>, vector<2x32xf32> -> vector<2x32xf32>
    %91 = vector.broadcast %5 : vector<1x32xf32> to vector<2x32xf32>
    %92 = arith.addf %90, %91 : vector<2x32xf32>
    %93 = math.tanh %92 : vector<2x32xf32>
    %94 = arith.truncf %86 : vector<2x32xf32> to vector<2x32xbf16>
    %95 = arith.truncf %93 : vector<2x32xf32> to vector<2x32xbf16>
    %96 = tpu.concatenate %94, %95 in 1 : vector<2x32xbf16>, vector<2x32xbf16> -> vector<2x64xbf16>
    %cst_24 = arith.constant dense<0.000000e+00> : vector<2x32xf32>
    %97 = tpu.matmul %96, %3, %cst_24 {dimension_numbers = #tpu.dot_dimension_numbers<[1], [0], [0], [1], [0, 0, 1, 1], [], []>} : vector<2x64xbf16>, vector<64x32xbf16>, vector<2x32xf32> -> vector<2x32xf32>
    %98 = vector.broadcast %5 : vector<1x32xf32> to vector<2x32xf32>
    %99 = arith.addf %97, %98 : vector<2x32xf32>
    %100 = math.tanh %99 : vector<2x32xf32>
    %c2 = arith.constant 2 : index
    %c0_25 = arith.constant 0 : index
    %101 = vector.load %arg2[%c2, %c0_25] : memref<6x32xf32, #tpu.memory_space<vmem>>, vector<1x32xf32>
    %c3 = arith.constant 3 : index
    %c0_26 = arith.constant 0 : index
    %102 = vector.load %arg2[%c3, %c0_26] : memref<6x32xf32, #tpu.memory_space<vmem>>, vector<1x32xf32>
    %cst_27 = arith.constant dense<0.000000e+00> : vector<2xf32>
    %103 = vector.multi_reduction <add>, %100, %cst_27 [1] : vector<2x32xf32> to vector<2xf32>
    %104 = vector.shape_cast %103 : vector<2xf32> to vector<2x1xf32>
    %cst_28 = arith.constant 3.200000e+01 : f32
    %105 = vector.broadcast %cst_28 : f32 to vector<2x1xf32>
    %106 = arith.divf %104, %105 : vector<2x1xf32>
    %107 = vector.broadcast %106 : vector<2x1xf32> to vector<2x32xf32>
    %108 = arith.subf %100, %107 : vector<2x32xf32>
    %109 = arith.mulf %108, %108 : vector<2x32xf32>
    %cst_29 = arith.constant dense<0.000000e+00> : vector<2xf32>
    %110 = vector.multi_reduction <add>, %109, %cst_29 [1] : vector<2x32xf32> to vector<2xf32>
    %111 = vector.shape_cast %110 : vector<2xf32> to vector<2x1xf32>
    %cst_30 = arith.constant 3.200000e+01 : f32
    %112 = vector.broadcast %cst_30 : f32 to vector<2x1xf32>
    %113 = arith.divf %111, %112 : vector<2x1xf32>
    %114 = vector.broadcast %106 : vector<2x1xf32> to vector<2x32xf32>
    %115 = arith.subf %100, %114 : vector<2x32xf32>
    %cst_31 = arith.constant 9.99999974E-6 : f32
    %116 = vector.broadcast %cst_31 : f32 to vector<2x1xf32>
    %117 = arith.addf %113, %116 : vector<2x1xf32>
    %118 = math.rsqrt %117 : vector<2x1xf32>
    %119 = vector.broadcast %118 : vector<2x1xf32> to vector<2x32xf32>
    %120 = arith.mulf %115, %119 : vector<2x32xf32>
    %121 = vector.broadcast %101 : vector<1x32xf32> to vector<2x32xf32>
    %122 = arith.mulf %120, %121 : vector<2x32xf32>
    %123 = vector.broadcast %102 : vector<1x32xf32> to vector<2x32xf32>
    %124 = arith.addf %122, %123 : vector<2x32xf32>
    %c4 = arith.constant 4 : index
    %c0_32 = arith.constant 0 : index
    %125 = vector.load %arg2[%c4, %c0_32] : memref<6x32xf32, #tpu.memory_space<vmem>>, vector<1x32xf32>
    %c5 = arith.constant 5 : index
    %c0_33 = arith.constant 0 : index
    %126 = vector.load %arg2[%c5, %c0_33] : memref<6x32xf32, #tpu.memory_space<vmem>>, vector<1x1xf32>
    %127 = vector.broadcast %125 : vector<1x32xf32> to vector<2x32xf32>
    %128 = arith.mulf %124, %127 : vector<2x32xf32>
    %cst_34 = arith.constant dense<0.000000e+00> : vector<2xf32>
    %129 = vector.multi_reduction <add>, %128, %cst_34 [1] : vector<2x32xf32> to vector<2xf32>
    %130 = vector.shape_cast %129 : vector<2xf32> to vector<2x1xf32>
    %131 = vector.broadcast %126 : vector<1x1xf32> to vector<2x1xf32>
    %132 = arith.addf %130, %131 : vector<2x1xf32>
    %c0_35 = arith.constant 0 : index
    %c0_36 = arith.constant 0 : index
    %133 = vector.load %arg3[%c0_35, %c0_36] : memref<2x1xf32, #tpu.memory_space<vmem>>, vector<2x1xf32>
    tpu.vector_store %arg3[%c0_35, %c0_36], %132 {strides = array<i32>} : memref<2x1xf32, #tpu.memory_space<vmem>>, vector<2x1xf32>,
    return
  }
}

</mosaic_0001>

<llo_original>
// kernel: tpu_custom_call.1
$region0: #{tpu_custom_call.1}
  #allocation0 [shape = 'u32[]', space=smem, size = 0x4, offset = 0x4, fixed_abs, tag = 'smem constant byte address 0x4 - core index']
  #allocation1 [shape = 'u32[72,128]{1,0:T(1,128)}', space=vmem, size = 0x9000, scoped, tag = 'internal scratch']
  %s0 = inlined_call_operand.vmem [shape: bf16[16,16], index: 0, kind: input, shape index: {}]
  %s1 = inlined_call_operand.vmem [shape: bf16[112,32], index: 1, kind: input, shape index: {}]
  %s2 = inlined_call_operand.vmem [shape: f32[6,32], index: 2, kind: input, shape index: {}]
  %s3 = inlined_call_operand.vmem [shape: f32[2,1], index: 3, kind: output, shape index: {}]
  %s4 = sld [smem:[#allocation0]]
  $region22: #{tpu_custom_call.1} parent=0
    _
  %s6 = ssub.s32 1, %s4
  %s7 = scalar_select 0, %s6, %s4
  // Predicated region
  $region2: #{tpu_custom_call.1} parent=0 // pred_check
    _
  $region3: #{tpu_custom_call.1} parent=0 // pred_check_branch
    %9 = sbr.rel (0) target = $region5
  $region4: #{tpu_custom_call.1} parent=0 // pred_region
    _
  $region5: #{tpu_custom_call.1} parent=0 // pred_fallthru
    _
  // Predicated region
  $region6: #{tpu_custom_call.1} parent=0 // pred_check
    _
  $region7: #{tpu_custom_call.1} parent=0 // pred_check_branch
    %11 = sbr.rel (0) target = $region9
  $region8: #{tpu_custom_call.1} parent=0 // pred_region
    _
  $region9: #{tpu_custom_call.1} parent=0 // pred_fallthru
    _
  // Predicated region
  $region10: #{tpu_custom_call.1} parent=0 // pred_check
    _
  $region11: #{tpu_custom_call.1} parent=0 // pred_check_branch
    %13 = sbr.rel (0) target = $region13
  $region12: #{tpu_custom_call.1} parent=0 // pred_region
    _
  $region13: #{tpu_custom_call.1} parent=0 // pred_fallthru
    _
  %v15 = vld [vmem:[%s1] sm:$0xf]
  %v16 = vld [vmem:[%s1 + $0x4] sm:$0xf]
  %v17 = vld [vmem:[%s1 + $0x28] sm:$0xf]
  %v18 = vld [vmem:[%s1 + $0x2c] sm:$0xf]
  %v19 = vld [vmem:[%s1 + $0x30] sm:$0xf]
  %v20 = vld [vmem:[%s1 + $0x34] sm:$0xf]
  %v21 = vld [vmem:[%s1 + $0x8] sm:$0xf]
  %v22 = vld [vmem:[%s1 + $0xc] sm:$0xf]
  %v23 = vld [vmem:[%s1 + $0x10] sm:$0xf]
  %v24 = vld [vmem:[%s1 + $0x14] sm:$0xf]
  %v25 = vld [vmem:[%s1 + $0x18] sm:$0xf]
  %v26 = vld [vmem:[%s1 + $0x1c] sm:$0xf]
  %v27 = vld [vmem:[%s1 + $0x20] sm:$0xf]
  %v28 = vld [vmem:[%s1 + $0x24] sm:$0xf]
  %v29 = vld [vmem:[%s2] sm:$0x1]
  %v30 = vld [vmem:[%s2 + $0x1] sm:$0x1]
  %v31 = vld [vmem:[%s0] sm:$0xf]
  %v32 = vld [vmem:[%s0 + $0x4] sm:$0xf]
  %v33 = vperm.slane %v29, 0
  %v36 = vunpack.c.l.b16 %v31
  %v37 = vunpack.c.l.b16 %v32
  %v38 = vpack.c.b16 %v37, %v36
  %v41 = vunpack.c.l.b16 %v15
  %v42 = vunpack.c.l.b16 %v16
  %v43 = vpack.c.b16 %v42, %v41
  %vm45 = vcmask 130048
  %v47 = vsel %vm45, %v38, 0
  %49 = vmatpush.bf16.msra.mxu0 0
  %50 = vmatpush.bf16.msra.mxu0 0
  %51 = vmatpush.bf16.msra.mxu0 0
  %52 = vmatpush.bf16.msra.mxu0 0
  %53 = vmatpush.bf16.msra.mxu0 0
  %54 = vmatpush.bf16.msra.mxu0 0
  %55 = vmatpush.bf16.msra.mxu0 0
  %56 = vmatpush.bf16.msra.mxu0 %v43
  %57 = vmatmul.bf16.gmra.mxu0 %v47
  %v58 = vpop.f32.mrf.mxu0
  %v59 = vadd.f32 %v33, %v58
  %v60 = vpop.f32.mrf.mxu0
  %v61 = vadd.f32 %v33, %v60
  %62 = vdwg.mxu0
  %v63 = vtanh.pop %v59
  %v64 = vpack.c.bf16 %v63, %v63
  %v69 = vunpack.c.l.b16 %v17
  %v70 = vunpack.c.l.b16 %v18
  %v71 = vunpack.c.l.b16 %v19
  %v72 = vunpack.c.l.b16 %v20
  %v73 = vpack.c.b16 %v70, %v69
  %v74 = vpack.c.b16 %v72, %v71
  %vm77 = vcmask 261120
  %v79 = vsel %vm77, %v64, 0
  %81 = vmatpush.bf16.msra.mxu0 0
  %82 = vmatpush.bf16.msra.mxu0 0
  %83 = vmatpush.bf16.msra.mxu0 0
  %84 = vmatpush.bf16.msra.mxu0 0
  %85 = vmatpush.bf16.msra.mxu0 0
  %86 = vmatpush.bf16.msra.mxu0 0
  %87 = vmatpush.bf16.msra.mxu0 %v74
  %88 = vmatpush.bf16.msra.mxu0 %v73
  %89 = vmatmul.bf16.gmra.mxu0 %v79
  %v90 = vpop.f32.mrf.mxu0
  %v91 = vadd.f32 0.0, %v90
  %v92 = vpop.f32.mrf.mxu0
  %93 = vdwg.mxu0
  %v95 = vrot.slane %v91, 6
  %v97 = vadd.f32 %v59, %v95
  %v98 = vtanh.pop %v97
  %v99 = vperm.slane %v30, 0
  %v104 = vunpack.c.l.b16 %v21
  %v105 = vunpack.c.l.b16 %v22
  %v106 = vunpack.c.l.b16 %v23
  %v107 = vunpack.c.l.b16 %v24
  %v108 = vpack.c.b16 %v105, %v104
  %v109 = vpack.c.b16 %v107, %v106
  %112 = vmatpush.bf16.msra.mxu0 0
  %113 = vmatpush.bf16.msra.mxu0 0
  %114 = vmatpush.bf16.msra.mxu0 0
  %115 = vmatpush.bf16.msra.mxu0 0
  %116 = vmatpush.bf16.msra.mxu0 0
  %117 = vmatpush.bf16.msra.mxu0 0
  %118 = vmatpush.bf16.msra.mxu0 %v109
  %119 = vmatpush.bf16.msra.mxu0 %v108
  %120 = vmatmul.bf16.gmra.mxu0 %v79
  %v121 = vpop.f32.mrf.mxu0
  %v122 = vadd.f32 %v99, %v121
  %v123 = vpop.f32.mrf.mxu0
  %124 = vdwg.mxu0
  %v125 = vtanh.pop %v122
  %v126 = vpack.c.bf16 %v98, %v98
  %v128 = vunpack.c.l.b16 %v126
  %v129 = vpack.c.b16 %v128, %v128
  %v130 = vrot.slane %v129, 1
  %v132 = vsel %vm77, %v130, 0
  %134 = vmatpush.bf16.msra.mxu0 0
  %135 = vmatpush.bf16.msra.mxu0 0
  %136 = vmatpush.bf16.msra.mxu0 0
  %137 = vmatpush.bf16.msra.mxu0 0
  %138 = vmatpush.bf16.msra.mxu0 0
  %139 = vmatpush.bf16.msra.mxu0 0
  %140 = vmatpush.bf16.msra.mxu0 %v74
  %141 = vmatpush.bf16.msra.mxu0 %v73
  %142 = vmatmul.bf16.gmra.mxu0 %v132
  %v143 = vpop.f32.mrf.mxu0
  %v144 = vadd.f32 0.0, %v143
  %v145 = vpop.f32.mrf.mxu0
  %146 = vdwg.mxu0
  %v148 = vrot.slane %v144, 4
  %v150 = vadd.f32 %v59, %v148
  %v151 = vtanh.pop %v150
  %v152 = vpack.c.bf16 %v125, %v125
  %v154 = vunpack.c.l.b16 %v152
  %v155 = vpack.c.b16 %v154, %v154
  %v156 = vrot.slane %v155, 7
  %157 = vrot.lane.b32.xlu0 %v156, 32
  %v158 = vpop.permute.xlu0 %157
  %v161 = vsel %vm77, %v126, %v158
  %v163 = vrot.slane %v161, 1
  %v168 = vunpack.c.l.b16 %v25
  %v169 = vunpack.c.l.b16 %v26
  %v170 = vunpack.c.l.b16 %v27
  %v171 = vunpack.c.l.b16 %v28
  %v172 = vpack.c.b16 %v169, %v168
  %v173 = vpack.c.b16 %v171, %v170
  %vm176 = vcmask 523264
  %v178 = vsel %vm176, %v163, 0
  %180 = vmatpush.bf16.msra.mxu0 0
  %181 = vmatpush.bf16.msra.mxu0 0
  %182 = vmatpush.bf16.msra.mxu0 0
  %183 = vmatpush.bf16.msra.mxu0 0
  %184 = vmatpush.bf16.msra.mxu0 %v173
  %185 = vmatpush.bf16.msra.mxu0 %v172
  %186 = vmatpush.bf16.msra.mxu0 %v109
  %187 = vmatpush.bf16.msra.mxu0 %v108
  %188 = vmatmul.bf16.gmra.mxu0 %v178
  %v189 = vpop.f32.mrf.mxu0
  %v190 = vadd.f32 %v99, %v189
  %v191 = vpop.f32.mrf.mxu0
  %192 = vdwg.mxu0
  %v193 = vtanh.pop %v190
  %v194 = vpack.c.bf16 %v151, %v151
  %v196 = vunpack.c.l.b16 %v194
  %v197 = vpack.c.b16 %v196, %v196
  %v198 = vrot.slane %v197, 2
  %v200 = vsel %vm77, %v198, 0
  %202 = vmatpush.bf16.msra.mxu0 0
  %203 = vmatpush.bf16.msra.mxu0 0
  %204 = vmatpush.bf16.msra.mxu0 0
  %205 = vmatpush.bf16.msra.mxu0 0
  %206 = vmatpush.bf16.msra.mxu0 0
  %207 = vmatpush.bf16.msra.mxu0 0
  %208 = vmatpush.bf16.msra.mxu0 %v74
  %209 = vmatpush.bf16.msra.mxu0 %v73
  %210 = vmatmul.bf16.gmra.mxu0 %v200
  %v211 = vpop.f32.mrf.mxu0
  %v212 = vadd.f32 0.0, %v211
  %v213 = vpop.f32.mrf.mxu0
  %214 = vdwg.mxu0
  %v216 = vrot.slane %v212, 2
  %v218 = vadd.f32 %v59, %v216
  %v219 = vtanh.pop %v218
  %v220 = vpack.c.bf16 %v193, %v193
  %v222 = vunpack.c.l.b16 %v220
  %v223 = vpack.c.b16 %v222, %v222
  %v224 = vrot.slane %v223, 6
  %225 = vrot.lane.b32.xlu0 %v224, 32
  %v226 = vpop.permute.xlu0 %225
  %v229 = vsel %vm77, %v194, %v226
  %v231 = vrot.slane %v229, 2
  %v233 = vsel %vm176, %v231, 0
  %235 = vmatpush.bf16.msra.mxu0 0
  %236 = vmatpush.bf16.msra.mxu0 0
  %237 = vmatpush.bf16.msra.mxu0 0
  %238 = vmatpush.bf16.msra.mxu0 0
  %239 = vmatpush.bf16.msra.mxu0 %v173
  %240 = vmatpush.bf16.msra.mxu0 %v172
  %241 = vmatpush.bf16.msra.mxu0 %v109
  %242 = vmatpush.bf16.msra.mxu0 %v108
  %243 = vmatmul.bf16.gmra.mxu0 %v233
  %v244 = vpop.f32.mrf.mxu0
  %v245 = vadd.f32 %v99, %v244
  %v246 = vpop.f32.mrf.mxu0
  %247 = vdwg.mxu0
  %v248 = vtanh.pop %v245
  %v249 = vpack.c.bf16 %v219, %v219
  %v251 = vunpack.c.l.b16 %v249
  %v252 = vpack.c.b16 %v251, %v251
  %v253 = vrot.slane %v252, 3
  %v255 = vsel %vm77, %v253, 0
  %257 = vmatpush.bf16.msra.mxu0 0
  %258 = vmatpush.bf16.msra.mxu0 0
  %259 = vmatpush.bf16.msra.mxu0 0
  %260 = vmatpush.bf16.msra.mxu0 0
  %261 = vmatpush.bf16.msra.mxu0 0
  %262 = vmatpush.bf16.msra.mxu0 0
  %263 = vmatpush.bf16.msra.mxu0 %v74
  %264 = vmatpush.bf16.msra.mxu0 %v73
  %265 = vmatmul.bf16.gmra.mxu0 %v255
  %v266 = vpop.f32.mrf.mxu0
  %v267 = vadd.f32 0.0, %v266
  %v268 = vpop.f32.mrf.mxu0
  %269 = vdwg.mxu0
  %v270 = vadd.f32 %v61, %v267
  %v271 = vtanh.pop %v270
  %v272 = vpack.c.bf16 %v248, %v248
  %v274 = vunpack.c.l.b16 %v272
  %v275 = vpack.c.b16 %v274, %v274
  %v276 = vrot.slane %v275, 5
  %277 = vrot.lane.b32.xlu0 %v276, 32
  %v278 = vpop.permute.xlu0 %277
  %v281 = vsel %vm77, %v249, %v278
  %v283 = vrot.slane %v281, 3
  %v285 = vsel %vm176, %v283, 0
  %287 = vmatpush.bf16.msra.mxu0 0
  %288 = vmatpush.bf16.msra.mxu0 0
  %289 = vmatpush.bf16.msra.mxu0 0
  %290 = vmatpush.bf16.msra.mxu0 0
  %291 = vmatpush.bf16.msra.mxu0 %v173
  %292 = vmatpush.bf16.msra.mxu0 %v172
  %293 = vmatpush.bf16.msra.mxu0 %v109
  %294 = vmatpush.bf16.msra.mxu0 %v108
  %295 = vmatmul.bf16.gmra.mxu0 %v285
  %v296 = vpop.f32.mrf.mxu0
  %v297 = vadd.f32 %v99, %v296
  %v298 = vpop.f32.mrf.mxu0
  %299 = vdwg.mxu0
  %v300 = vtanh.pop %v297
  %v301 = vpack.c.bf16 %v271, %v271
  %v303 = vsel %vm77, %v301, 0
  %305 = vmatpush.bf16.msra.mxu0 0
  %306 = vmatpush.bf16.msra.mxu0 0
  %307 = vmatpush.bf16.msra.mxu0 0
  %308 = vmatpush.bf16.msra.mxu0 0
  %309 = vmatpush.bf16.msra.mxu0 0
  %310 = vmatpush.bf16.msra.mxu0 0
  %311 = vmatpush.bf16.msra.mxu0 %v74
  %312 = vmatpush.bf16.msra.mxu0 %v73
  %313 = vmatmul.bf16.gmra.mxu0 %v303
  %v314 = vpop.f32.mrf.mxu0
  %v315 = vadd.f32 0.0, %v314
  %v316 = vpop.f32.mrf.mxu0
  %317 = vdwg.mxu0
  %v319 = vrot.slane %v315, 6
  %v321 = vadd.f32 %v61, %v319
  %v322 = vtanh.pop %v321
  %v323 = vpack.c.bf16 %v300, %v300
  %v325 = vunpack.c.l.b16 %v323
  %v326 = vpack.c.b16 %v325, %v325
  %327 = vrot.lane.b32.xlu0 %v326, 32
  %v328 = vpop.permute.xlu0 %327
  %v330 = vsel %vm77, %v301, %v328
  %v331 = vsel %vm176, %v330, 0
  %333 = vmatpush.bf16.msra.mxu0 0
  %334 = vmatpush.bf16.msra.mxu0 0
  %335 = vmatpush.bf16.msra.mxu0 0
  %336 = vmatpush.bf16.msra.mxu0 0
  %337 = vmatpush.bf16.msra.mxu0 %v173
  %338 = vmatpush.bf16.msra.mxu0 %v172
  %339 = vmatpush.bf16.msra.mxu0 %v109
  %340 = vmatpush.bf16.msra.mxu0 %v108
  %341 = vmatmul.bf16.gmra.mxu0 %v331
  %v342 = vpop.f32.mrf.mxu0
  %v343 = vadd.f32 %v99, %v342
  %v344 = vpop.f32.mrf.mxu0
  %345 = vdwg.mxu0
  %v346 = vtanh.pop %v343
  %v347 = vpack.c.bf16 %v322, %v322
  %v349 = vunpack.c.l.b16 %v347
  %v350 = vpack.c.b16 %v349, %v349
  %v351 = vrot.slane %v350, 1
  %v353 = vsel %vm77, %v351, 0
  %355 = vmatpush.bf16.msra.mxu0 0
  %356 = vmatpush.bf16.msra.mxu0 0
  %357 = vmatpush.bf16.msra.mxu0 0
  %358 = vmatpush.bf16.msra.mxu0 0
  %359 = vmatpush.bf16.msra.mxu0 0
  %360 = vmatpush.bf16.msra.mxu0 0
  %361 = vmatpush.bf16.msra.mxu0 %v74
  %362 = vmatpush.bf16.msra.mxu0 %v73
  %363 = vmatmul.bf16.gmra.mxu0 %v353
  %v364 = vpop.f32.mrf.mxu0
  %v365 = vadd.f32 0.0, %v364
  %v366 = vpop.f32.mrf.mxu0
  %367 = vdwg.mxu0
  %v369 = vrot.slane %v365, 4
  %v371 = vadd.f32 %v61, %v369
  %v372 = vtanh.pop %v371
  %v373 = vpack.c.bf16 %v346, %v346
  %v375 = vunpack.c.l.b16 %v373
  %v376 = vpack.c.b16 %v375, %v375
  %v377 = vrot.slane %v376, 7
  %378 = vrot.lane.b32.xlu0 %v377, 32
  %v379 = vpop.permute.xlu0 %378
  %v382 = vsel %vm77, %v347, %v379
  %v384 = vrot.slane %v382, 1
  %v386 = vsel %vm176, %v384, 0
  %388 = vmatpush.bf16.msra.mxu0 0
  %389 = vmatpush.bf16.msra.mxu0 0
  %390 = vmatpush.bf16.msra.mxu0 0
  %391 = vmatpush.bf16.msra.mxu0 0
  %392 = vmatpush.bf16.msra.mxu0 %v173
  %393 = vmatpush.bf16.msra.mxu0 %v172
  %394 = vmatpush.bf16.msra.mxu0 %v109
  %395 = vmatpush.bf16.msra.mxu0 %v108
  %396 = vmatmul.bf16.gmra.mxu0 %v386
  %v397 = vpop.f32.mrf.mxu0
  %v398 = vadd.f32 %v99, %v397
  %v399 = vpop.f32.mrf.mxu0
  %400 = vdwg.mxu0
  %v401 = vtanh.pop %v398
  %v402 = vpack.c.bf16 %v372, %v372
  %v404 = vunpack.c.l.b16 %v402
  %v405 = vpack.c.b16 %v404, %v404
  %v406 = vrot.slane %v405, 2
  %v408 = vsel %vm77, %v406, 0
  %410 = vmatpush.bf16.msra.mxu0 0
  %411 = vmatpush.bf16.msra.mxu0 0
  %412 = vmatpush.bf16.msra.mxu0 0
  %413 = vmatpush.bf16.msra.mxu0 0
  %414 = vmatpush.bf16.msra.mxu0 0
  %415 = vmatpush.bf16.msra.mxu0 0
  %416 = vmatpush.bf16.msra.mxu0 %v74
  %417 = vmatpush.bf16.msra.mxu0 %v73
  %418 = vmatmul.bf16.gmra.mxu0 %v408
  %v419 = vpop.f32.mrf.mxu0
  %v420 = vadd.f32 0.0, %v419
  %v421 = vpop.f32.mrf.mxu0
  %422 = vdwg.mxu0
  %v424 = vrot.slane %v420, 2
  %v426 = vadd.f32 %v61, %v424
  %v427 = vtanh.pop %v426
  %v428 = vpack.c.bf16 %v401, %v401
  %v430 = vunpack.c.l.b16 %v428
  %v431 = vpack.c.b16 %v430, %v430
  %v432 = vrot.slane %v431, 6
  %433 = vrot.lane.b32.xlu0 %v432, 32
  %v434 = vpop.permute.xlu0 %433
  %v437 = vsel %vm77, %v402, %v434
  %v439 = vrot.slane %v437, 2
  %v441 = vsel %vm176, %v439, 0
  %443 = vmatpush.bf16.msra.mxu0 0
  %444 = vmatpush.bf16.msra.mxu0 0
  %445 = vmatpush.bf16.msra.mxu0 0
  %446 = vmatpush.bf16.msra.mxu0 0
  %447 = vmatpush.bf16.msra.mxu0 %v173
  %448 = vmatpush.bf16.msra.mxu0 %v172
  %449 = vmatpush.bf16.msra.mxu0 %v109
  %450 = vmatpush.bf16.msra.mxu0 %v108
  %451 = vmatmul.bf16.gmra.mxu0 %v441
  %v452 = vpop.f32.mrf.mxu0
  %v453 = vadd.f32 %v99, %v452
  %v454 = vpop.f32.mrf.mxu0
  %455 = vdwg.mxu0
  %v456 = vtanh.pop %v453
  %v457 = vpack.c.bf16 %v427, %v427
  %v458 = vpack.c.bf16 %v456, %v456
  %v460 = vunpack.c.l.b16 %v458
  %v461 = vpack.c.b16 %v460, %v460
  %v462 = vrot.slane %v461, 5
  %463 = vrot.lane.b32.xlu0 %v462, 32
  %v464 = vpop.permute.xlu0 %463
  %v467 = vsel %vm77, %v457, %v464
  %v469 = vrot.slane %v467, 3
  %v471 = vsel %vm176, %v469, 0
  %473 = vmatpush.bf16.msra.mxu0 0
  %474 = vmatpush.bf16.msra.mxu0 0
  %475 = vmatpush.bf16.msra.mxu0 0
  %476 = vmatpush.bf16.msra.mxu0 0
  %477 = vmatpush.bf16.msra.mxu0 %v173
  %478 = vmatpush.bf16.msra.mxu0 %v172
  %479 = vmatpush.bf16.msra.mxu0 %v109
  %480 = vmatpush.bf16.msra.mxu0 %v108
  %481 = vmatmul.bf16.gmra.mxu0 %v471
  %v482 = vpop.f32.mrf.mxu0
  %v483 = vadd.f32 %v99, %v482
  %v484 = vpop.f32.mrf.mxu0
  %485 = vdwg.mxu0
  %v486 = vtanh.pop %v483
  %v487 = vld [vmem:[%s2 + $0x2] sm:$0x1]
  %v488 = vld [vmem:[%s2 + $0x3] sm:$0x1]
  %vm489 = vcmask 254976
  %v490 = vsel %vm489, %v486, 0.0
  %491 = vadd.xlane.f32.xlu0 %v490
  %v492 = vpop.xlane.xlu0 %491
  %v493 = vrcp.pop 32.0
  %v494 = vmul.f32 32.0, %v493
  %v495 = vsub.f32 1.0, %v494
  %v496 = vmul.f32 %v493, %v495
  %v497 = vadd.f32 %v493, %v496
  %vm498 = vweird.f32 %v493
  %v499 = vsel %vm498, %v493, %v497
  %v500 = vmul.f32 %v492, %v499
  %v501 = vsub.f32 %v486, %v500
  %v502 = vmul.f32 %v501, %v501
  %v503 = vsel %vm489, %v502, 0.0
  %504 = vadd.xlane.f32.xlu0 %v503
  %v505 = vpop.xlane.xlu0 %504
  %v506 = vmul.f32 %v505, %v499
  %v507 = vadd.f32 %v506, 1e-05
  %v508 = vrsqrt.pop %v507
  %v509 = vmul.f32 %v508, %v507
  %v510 = vmul.f32 %v509, %v508
  %v511 = vmul.f32 0.5, %v510
  %v512 = vsub.f32 1.5, %v511
  %v513 = vmul.f32 %v508, %v512
  %vm514 = vweird.f32 %v507
  %vm515 = vweird.f32 %v508
  %vm516 = vmor %vm514, %vm515
  %v517 = vsel %vm516, %v508, %v513
  %v518 = vmul.f32 %v501, %v517
  %v519 = vperm.slane %v487, 0
  %v520 = vmul.f32 %v518, %v519
  %v521 = vperm.slane %v488, 0
  %v522 = vadd.f32 %v520, %v521
  %v523 = vld [vmem:[%s2 + $0x4] sm:$0x1]
  %v524 = vld [vmem:[%s2 + $0x5] sm:$0x1]
  %v525 = vperm.slane %v523, 0
  %v526 = vmul.f32 %v522, %v525
  %v527 = vsel %vm489, %v526, 0.0
  %528 = vadd.xlane.f32.xlu0 %v527
  %v529 = vpop.xlane.xlu0 %528
  %v530 = vperm.slane %v524, 0
  %v531 = vadd.f32 %v529, %v530
  %vm532 = vcmask 1024
  %533 = vst.msk [vmem:[%s3] sm:$0x3] %vm532, %v531
  // Predicated region
  $region14: #{tpu_custom_call.1} parent=0 // pred_check
    _
  $region15: #{tpu_custom_call.1} parent=0 // pred_check_branch
    %535 = sbr.rel (0) target = $region17
  $region16: #{tpu_custom_call.1} parent=0 // pred_region
    _
  $region17: #{tpu_custom_call.1} parent=0 // pred_fallthru
    _
  // Predicated region
  $region18: #{tpu_custom_call.1} parent=0 // pred_check
    _
  $region19: #{tpu_custom_call.1} parent=0 // pred_check_branch
    %537 = sbr.rel (0) target = $region21
  $region20: #{tpu_custom_call.1} parent=0 // pred_region
    _
  $region21: #{tpu_custom_call.1} parent=0 // pred_fallthru
    _

</llo_original>
